<compile_context>
chip_gen: v6e
topology: v6e:2x2x1
jax: 0.10.0
libtpu: 0.0.40
codegen_flags: <defaults>
</compile_context>

<pallas_src>
import jax
import jax.numpy as jnp
from jax.experimental import pallas as pl
from jax.experimental.pallas import tpu as pltpu


def _spatial_att_kernel(x_ref, p_ref, o_ref):
    # x_ref: (b*n, c*t)        lane-dense input slab
    # p_ref: (c*t + 2n, width) packed params: [M ; bs|pad ; Vs|pad]
    # o_ref: (b*n, n)          softmax(S, vertex axis) per batch block
    n = o_ref.shape[1]
    bn, ct = x_ref.shape
    b = bn // n

    x2 = x_ref[...]                                    # (b*n, ct)
    p = p_ref[...]                                     # (ct + 2n, width)
    M = p[0:ct, 0:ct]                                  # (ct, ct)   fused Wa @ Wb^T
    bs = p[ct:ct + n, 0:n]                             # (n, n)
    vs = p[ct + n:ct + 2 * n, 0:n]                     # (n, n)

    # Stage 1 for ALL batches with a single MXU push:
    #   product_b = x_b @ Wa @ Wb^T @ x_b^T = (x2 @ M)_b @ x_b^T
    xm = jnp.dot(x2, M, preferred_element_type=jnp.float32)          # (b*n, ct)

    # b is tiny & static -> unrolled. All slices are sublane-aligned (offsets multiple of 8).
    for bi in range(b):
        r0, r1 = bi * n, (bi + 1) * n
        prod = jax.lax.dot_general(
            xm[r0:r1, :], x2[r0:r1, :], (((1,), (1,)), ((), ())),
            preferred_element_type=jnp.float32)                      # (n, n)

        z = prod + bs
        sig = 0.5 * (jnp.tanh(0.5 * z) + 1.0)                        # sigmoid via EUP tanh

        s = jnp.dot(vs, sig, preferred_element_type=jnp.float32)     # (n, n)  Vs @ sigmoid(...)

        # softmax over the vertex axis (axis 0 within each batch block)
        m = jnp.max(s, axis=0, keepdims=True)
        e = jnp.exp(s - m)
        inv = pl.reciprocal(jnp.sum(e, axis=0, keepdims=True), approx=False)
        o_ref[r0:r1, :] = e * inv


def spatial_attention_layer(x, W1, W2, W3, bs, Vs):
    """x: (b, n, c, t) f32. Returns (b, n, n) f32 — softmax over dim 1 (vertex axis)."""
    b, n, c, t = x.shape
    ct = c * t

    # Sublane-alignment assumptions of the in-kernel static slices (true for 2,16,4,8).
    if n % 8 != 0 or ct % 8 != 0:
        raise ValueError(
            f"spatial_attention_layer kernel requires num_of_vertices and "
            f"in_channels*in_seq_length to be multiples of 8; got n={n}, c*t={ct}")

    # Host-side fused weight:
    #   lhs[b,n,t'] = sum_{c,t} x[b,n,c,t] W1[t] W2[c,t']  -> Wa[(c,t), t'] = W1[t] * W2[c,t']
    #   rhs[b,n,t ] = sum_{c}   x[b,n,c,t] W3[c]           -> Wb[(c,t'),t ] = W3[c] * I[t',t]
    #   product_b = lhs_b @ rhs_b^T = x_b @ (Wa @ Wb^T) @ x_b^T
    Wa = (W1[None, :, None] * W2[:, None, :]).reshape(ct, t)
    Wb = (W3[:, None, None] * jnp.eye(t, dtype=x.dtype)[None, :, :]).reshape(ct, t)
    M = jnp.dot(Wa, Wb.T, preferred_element_type=jnp.float32)        # (ct, ct)

    # Pack [M ; bs ; Vs] into a single zero-padded parameter slab -> one operand DMA.
    width = max(ct, n)
    def _pad_cols(a):
        return jnp.pad(a, ((0, 0), (0, width - a.shape[1]))) if a.shape[1] < width else a
    params = jnp.concatenate(
        [_pad_cols(M), _pad_cols(bs.reshape(n, n)), _pad_cols(Vs)], axis=0
    ).astype(jnp.float32)                                            # (ct + 2n, width)

    x2 = x.reshape(b * n, ct)                                        # lane-dense input slab

    out2 = pl.pallas_call(
        _spatial_att_kernel,
        out_shape=jax.ShapeDtypeStruct((b * n, n), jnp.float32),
        in_specs=[
            pl.BlockSpec(memory_space=pltpu.MemorySpace.VMEM),       # x slab, whole-array
            pl.BlockSpec(memory_space=pltpu.MemorySpace.VMEM),       # packed params, whole-array
        ],
        out_specs=pl.BlockSpec(memory_space=pltpu.MemorySpace.VMEM),
    )(x2, params)

    return out2.reshape(b, n, n)


def _reference(x, W1, W2, W3, bs, Vs):
    lhs = jnp.einsum('bnct,t->bnc', x, W1)
    lhs = jnp.einsum('bnc,ct->bnt', lhs, W2)
    rhs = jnp.einsum('c,bnct->bnt', W3, x)
    rhs = jnp.swapaxes(rhs, -1, -2)                 # (b, t, n)
    product = jnp.einsum('bnt,btm->bnm', lhs, rhs)  # (b, n, n)
    S = jnp.einsum('nm,bmk->bnk', Vs, jax.nn.sigmoid(product + bs))
    return jax.nn.softmax(S, axis=1)


if __name__ == "__main__":
    # SpatialAttentionLayer(in_channels=4, num_of_vertices=16, in_seq_length=8)
    b, n, c, t = 2, 16, 4, 8

    key = jax.random.PRNGKey(0)
    kx, k1, k2, k3, kb, kv = jax.random.split(key, 6)

    x = jax.random.normal(kx, (b, n, c, t), dtype=jnp.float32)

    # Deterministic parameter init (torch module leaves them uninitialized).
    W1 = jax.random.normal(k1, (t,), dtype=jnp.float32) * 0.1          # (in_seq_length,)
    W2 = jax.random.normal(k2, (c, t), dtype=jnp.float32) * 0.1        # (in_channels, in_seq_length)
    W3 = jax.random.normal(k3, (c,), dtype=jnp.float32) * 0.1          # (in_channels,)
    bs = jax.random.normal(kb, (1, n, n), dtype=jnp.float32) * 0.1     # (1, n, n)
    Vs = jax.random.normal(kv, (n, n), dtype=jnp.float32) * 0.1        # (n, n)

    out = spatial_attention_layer(x, W1, W2, W3, bs, Vs)
    out = jax.block_until_ready(out)

    ref = _reference(x, W1, W2, W3, bs, Vs)
    assert out.shape == (b, n, n)
    assert jnp.allclose(out, ref, atol=1e-5, rtol=1e-5), "mismatch vs reference"

    print("KERNEL_OK")
</pallas_src>

<mosaic_0001>
module attributes {stable_mosaic.version = 11 : i64} {
  func.func @_spatial_att_kernel(%arg0: memref<32x32xf32, #tpu.memory_space<vmem>>, %arg1: memref<64x32xf32, #tpu.memory_space<vmem>>, %arg2: memref<32x16xf32, #tpu.memory_space<vmem>>) attributes {dimension_semantics = [], scalar_prefetch = 0 : i64, scratch_operands = 0 : i64, tpu.core_type = #tpu.core_type<tc>} {
    %c0 = arith.constant 0 : index
    %c0_0 = arith.constant 0 : index
    %0 = vector.load %arg0[%c0, %c0_0] : memref<32x32xf32, #tpu.memory_space<vmem>>, vector<32x32xf32>
    %c0_1 = arith.constant 0 : index
    %c0_2 = arith.constant 0 : index
    %1 = vector.load %arg1[%c0_1, %c0_2] : memref<64x32xf32, #tpu.memory_space<vmem>>, vector<64x32xf32>
    %2 = vector.extract_strided_slice %1 {offsets = [0, 0], sizes = [32, 32], strides = [1, 1]} : vector<64x32xf32> to vector<32x32xf32>
    %3 = vector.extract_strided_slice %1 {offsets = [32, 0], sizes = [16, 16], strides = [1, 1]} : vector<64x32xf32> to vector<16x16xf32>
    %4 = vector.extract_strided_slice %1 {offsets = [48, 0], sizes = [16, 16], strides = [1, 1]} : vector<64x32xf32> to vector<16x16xf32>
    %cst = arith.constant dense<0.000000e+00> : vector<32x32xf32>
    %5 = tpu.matmul %0, %2, %cst {dimension_numbers = #tpu.dot_dimension_numbers<[1], [0], [0], [1], [0, 0, 1, 1], [], []>} : vector<32x32xf32>, vector<32x32xf32>, vector<32x32xf32> -> vector<32x32xf32>
    %6 = vector.extract_strided_slice %5 {offsets = [0, 0], sizes = [16, 32], strides = [1, 1]} : vector<32x32xf32> to vector<16x32xf32>
    %7 = vector.extract_strided_slice %0 {offsets = [0, 0], sizes = [16, 32], strides = [1, 1]} : vector<32x32xf32> to vector<16x32xf32>
    %cst_3 = arith.constant dense<0.000000e+00> : vector<16x16xf32>
    %8 = tpu.matmul %6, %7, %cst_3 {dimension_numbers = #tpu.dot_dimension_numbers<[1], [1], [0], [0], [0, 0, 1, 0], [], []>} : vector<16x32xf32>, vector<16x32xf32>, vector<16x16xf32> -> vector<16x16xf32>
    %9 = arith.addf %8, %3 : vector<16x16xf32>
    %cst_4 = arith.constant 5.000000e-01 : f32
    %10 = vector.broadcast %cst_4 : f32 to vector<16x16xf32>
    %11 = arith.mulf %10, %9 : vector<16x16xf32>
    %12 = math.tanh %11 : vector<16x16xf32>
    %cst_5 = arith.constant 1.000000e+00 : f32
    %13 = vector.broadcast %cst_5 : f32 to vector<16x16xf32>
    %14 = arith.addf %12, %13 : vector<16x16xf32>
    %cst_6 = arith.constant 5.000000e-01 : f32
    %15 = vector.broadcast %cst_6 : f32 to vector<16x16xf32>
    %16 = arith.mulf %15, %14 : vector<16x16xf32>
    %cst_7 = arith.constant dense<0.000000e+00> : vector<16x16xf32>
    %17 = tpu.matmul %4, %16, %cst_7 {dimension_numbers = #tpu.dot_dimension_numbers<[1], [0], [0], [1], [0, 0, 1, 1], [], []>} : vector<16x16xf32>, vector<16x16xf32>, vector<16x16xf32> -> vector<16x16xf32>
    %cst_8 = arith.constant dense<0xFF800000> : vector<16xf32>
    %18 = vector.multi_reduction <maximumf>, %17, %cst_8 [0] : vector<16x16xf32> to vector<16xf32>
    %19 = vector.shape_cast %18 : vector<16xf32> to vector<1x16xf32>
    %20 = vector.broadcast %19 : vector<1x16xf32> to vector<16x16xf32>
    %21 = arith.subf %17, %20 : vector<16x16xf32>
    %22 = math.exp %21 : vector<16x16xf32>
    %cst_9 = arith.constant dense<0.000000e+00> : vector<16xf32>
    %23 = vector.multi_reduction <add>, %22, %cst_9 [0] : vector<16x16xf32> to vector<16xf32>
    %24 = vector.shape_cast %23 : vector<16xf32> to vector<1x16xf32>
    %25 = tpu.reciprocal %24 : vector<1x16xf32> -> vector<1x16xf32>
    %26 = vector.broadcast %25 : vector<1x16xf32> to vector<16x16xf32>
    %27 = arith.mulf %22, %26 : vector<16x16xf32>
    %c0_10 = arith.constant 0 : index
    %c0_11 = arith.constant 0 : index
    %28 = vector.load %arg2[%c0_10, %c0_11] : memref<32x16xf32, #tpu.memory_space<vmem>>, vector<16x16xf32>
    tpu.vector_store %arg2[%c0_10, %c0_11], %27 {strides = array<i32>} : memref<32x16xf32, #tpu.memory_space<vmem>>, vector<16x16xf32>,
    %29 = vector.extract_strided_slice %5 {offsets = [16, 0], sizes = [16, 32], strides = [1, 1]} : vector<32x32xf32> to vector<16x32xf32>
    %30 = vector.extract_strided_slice %0 {offsets = [16, 0], sizes = [16, 32], strides = [1, 1]} : vector<32x32xf32> to vector<16x32xf32>
    %cst_12 = arith.constant dense<0.000000e+00> : vector<16x16xf32>
    %31 = tpu.matmul %29, %30, %cst_12 {dimension_numbers = #tpu.dot_dimension_numbers<[1], [1], [0], [0], [0, 0, 1, 0], [], []>} : vector<16x32xf32>, vector<16x32xf32>, vector<16x16xf32> -> vector<16x16xf32>
    %32 = arith.addf %31, %3 : vector<16x16xf32>
    %cst_13 = arith.constant 5.000000e-01 : f32
    %33 = vector.broadcast %cst_13 : f32 to vector<16x16xf32>
    %34 = arith.mulf %33, %32 : vector<16x16xf32>
    %35 = math.tanh %34 : vector<16x16xf32>
    %cst_14 = arith.constant 1.000000e+00 : f32
    %36 = vector.broadcast %cst_14 : f32 to vector<16x16xf32>
    %37 = arith.addf %35, %36 : vector<16x16xf32>
    %cst_15 = arith.constant 5.000000e-01 : f32
    %38 = vector.broadcast %cst_15 : f32 to vector<16x16xf32>
    %39 = arith.mulf %38, %37 : vector<16x16xf32>
    %cst_16 = arith.constant dense<0.000000e+00> : vector<16x16xf32>
    %40 = tpu.matmul %4, %39, %cst_16 {dimension_numbers = #tpu.dot_dimension_numbers<[1], [0], [0], [1], [0, 0, 1, 1], [], []>} : vector<16x16xf32>, vector<16x16xf32>, vector<16x16xf32> -> vector<16x16xf32>
    %cst_17 = arith.constant dense<0xFF800000> : vector<16xf32>
    %41 = vector.multi_reduction <maximumf>, %40, %cst_17 [0] : vector<16x16xf32> to vector<16xf32>
    %42 = vector.shape_cast %41 : vector<16xf32> to vector<1x16xf32>
    %43 = vector.broadcast %42 : vector<1x16xf32> to vector<16x16xf32>
    %44 = arith.subf %40, %43 : vector<16x16xf32>
    %45 = math.exp %44 : vector<16x16xf32>
    %cst_18 = arith.constant dense<0.000000e+00> : vector<16xf32>
    %46 = vector.multi_reduction <add>, %45, %cst_18 [0] : vector<16x16xf32> to vector<16xf32>
    %47 = vector.shape_cast %46 : vector<16xf32> to vector<1x16xf32>
    %48 = tpu.reciprocal %47 : vector<1x16xf32> -> vector<1x16xf32>
    %49 = vector.broadcast %48 : vector<1x16xf32> to vector<16x16xf32>
    %50 = arith.mulf %45, %49 : vector<16x16xf32>
    %c16 = arith.constant 16 : index
    %c0_19 = arith.constant 0 : index
    %51 = vector.load %arg2[%c16, %c0_19] : memref<32x16xf32, #tpu.memory_space<vmem>>, vector<16x16xf32>
    tpu.vector_store %arg2[%c16, %c0_19], %50 {strides = array<i32>} : memref<32x16xf32, #tpu.memory_space<vmem>>, vector<16x16xf32>,
    return
  }
}

</mosaic_0001>

<llo_original>
// kernel: tpu_custom_call.1
$region0: #{tpu_custom_call.1}
  #allocation0 [shape = 'u32[]', space=smem, size = 0x4, offset = 0x4, fixed_abs, tag = 'smem constant byte address 0x4 - core index']
  #allocation1 [shape = 'u32[144,128]{1,0:T(1,128)}', space=vmem, size = 0x12000, scoped, tag = 'internal scratch']
  %s0 = inlined_call_operand.vmem [shape: f32[32,32], index: 0, kind: input, shape index: {}]
  %s1 = inlined_call_operand.vmem [shape: f32[64,32], index: 1, kind: input, shape index: {}]
  %s2 = inlined_call_operand.vmem [shape: f32[32,16], index: 2, kind: output, shape index: {}]
  %s3 = sld [smem:[#allocation0]]
  $region18: #{tpu_custom_call.1} parent=0
    _
  %s5 = ssub.s32 1, %s3
  %s6 = scalar_select 0, %s5, %s3
  // Predicated region
  $region2: #{tpu_custom_call.1} parent=0 // pred_check
    _
  $region3: #{tpu_custom_call.1} parent=0 // pred_check_branch
    %8 = sbr.rel (0) target = $region5
  $region4: #{tpu_custom_call.1} parent=0 // pred_region
    _
  $region5: #{tpu_custom_call.1} parent=0 // pred_fallthru
    _
  // Predicated region
  $region6: #{tpu_custom_call.1} parent=0 // pred_check
    _
  $region7: #{tpu_custom_call.1} parent=0 // pred_check_branch
    %10 = sbr.rel (0) target = $region9
  $region8: #{tpu_custom_call.1} parent=0 // pred_region
    _
  $region9: #{tpu_custom_call.1} parent=0 // pred_fallthru
    _
  %v11 = vld [vmem:[%s0] sm:$0xff]
  %v12 = vld [vmem:[%s0 + $0x8] sm:$0xff]
  %v13 = vld [vmem:[%s0 + $0x10] sm:$0xff]
  %v14 = vld [vmem:[%s0 + $0x18] sm:$0xff]
  %v15 = vld [vmem:[%s1] sm:$0xff]
  %v16 = vld [vmem:[%s1 + $0x8] sm:$0xff]
  %v17 = vld [vmem:[%s1 + $0x10] sm:$0xff]
  %v18 = vld [vmem:[%s1 + $0x18] sm:$0xff]
  %v19 = vld [vmem:[%s1 + $0x20] sm:$0xff]
  %v20 = vld [vmem:[%s1 + $0x28] sm:$0xff]
  %v21 = vld [vmem:[%s1 + $0x30] sm:$0xff]
  %v22 = vld [vmem:[%s1 + $0x38] sm:$0xff]
  %vm23 = vcmask 261120
  %v25 = vsel %vm23, %v11, 0
  %v28 = vsel %vm23, %v12, 0
  %v31 = vsel %vm23, %v13, 0
  %v34 = vsel %vm23, %v14, 0
  %36 = vmatprep.subr.mxu0 0.0
  %37 = vmatpush1.msra.mxu0 0.0
  %38 = vmatprep.subr.mxu0 0.0
  %39 = vmatpush1.msra.mxu0 0.0
  %40 = vmatprep.subr.mxu0 0.0
  %41 = vmatpush1.msra.mxu0 0.0
  %42 = vmatprep.subr.mxu0 0.0
  %43 = vmatpush1.msra.mxu0 0.0
  %44 = vmatprep.subr.mxu0 0.0
  %45 = vmatpush1.msra.mxu0 0.0
  %46 = vmatprep.subr.mxu0 0.0
  %47 = vmatpush1.msra.mxu0 0.0
  %48 = vmatprep.subr.mxu0 0.0
  %49 = vmatpush1.msra.mxu0 0.0
  %50 = vmatprep.subr.mxu0 0.0
  %51 = vmatpush1.msra.mxu0 0.0
  %52 = vmatprep.subr.mxu0 0.0
  %53 = vmatpush1.msra.mxu0 0.0
  %54 = vmatprep.subr.mxu0 0.0
  %55 = vmatpush1.msra.mxu0 0.0
  %56 = vmatprep.subr.mxu0 0.0
  %57 = vmatpush1.msra.mxu0 0.0
  %58 = vmatprep.subr.mxu0 0.0
  %59 = vmatpush1.msra.mxu0 0.0
  %60 = vmatprep.subr.mxu0 0.0
  %61 = vmatpush1.msra.mxu0 %v18
  %62 = vmatprep.subr.mxu0 0.0
  %63 = vmatpush1.msra.mxu0 %v17
  %64 = vmatprep.subr.mxu0 0.0
  %65 = vmatpush1.msra.mxu0 %v16
  %66 = vmatprep.subr.mxu0 0.0
  %67 = vmatpush1.msra.mxu0 %v15
  %68 = vmatprep.subr.mxu0 0.0
  %69 = vmatpush2.msra.mxu0 0.0
  %70 = vmatprep.subr.mxu0 0.0
  %71 = vmatpush2.msra.mxu0 0.0
  %72 = vmatprep.subr.mxu0 0.0
  %73 = vmatpush2.msra.mxu0 0.0
  %74 = vmatprep.subr.mxu0 0.0
  %75 = vmatpush2.msra.mxu0 0.0
  %76 = vmatprep.subr.mxu0 0.0
  %77 = vmatpush2.msra.mxu0 0.0
  %78 = vmatprep.subr.mxu0 0.0
  %79 = vmatpush2.msra.mxu0 0.0
  %80 = vmatprep.subr.mxu0 0.0
  %81 = vmatpush2.msra.mxu0 0.0
  %82 = vmatprep.subr.mxu0 0.0
  %83 = vmatpush2.msra.mxu0 0.0
  %84 = vmatprep.subr.mxu0 0.0
  %85 = vmatpush2.msra.mxu0 0.0
  %86 = vmatprep.subr.mxu0 0.0
  %87 = vmatpush2.msra.mxu0 0.0
  %88 = vmatprep.subr.mxu0 0.0
  %89 = vmatpush2.msra.mxu0 0.0
  %90 = vmatprep.subr.mxu0 0.0
  %91 = vmatpush2.msra.mxu0 0.0
  %92 = vmatprep.subr.mxu0 0.0
  %93 = vmatpush2.msra.mxu0 0.0
  %94 = vmatprep.subr.mxu0 0.0
  %95 = vmatpush2.msra.mxu0 0.0
  %96 = vmatprep.subr.mxu0 0.0
  %97 = vmatpush2.msra.mxu0 0.0
  %98 = vmatprep.subr.mxu0 0.0
  %99 = vmatpush2.msra.mxu0 0.0
  %100 = vmatprep.mubr.f32.mxu0 0.0
  %101 = vmatmul.mubr.f32.gmra.mxu0 %v25
  %v102 = vpop.f32.mrf.mxu0
  %v103 = vadd.f32 0.0, %v102
  %v104 = vpop.f32.mrf.mxu0
  %105 = vmatprep.mubr.f32.mxu0 0.0
  %106 = vmatmul.mubr.f32.gmra.mxu0 %v28
  %v107 = vpop.f32.mrf.mxu0
  %v108 = vadd.f32 0.0, %v107
  %v109 = vpop.f32.mrf.mxu0
  %110 = vmatprep.mubr.f32.mxu0 0.0
  %111 = vmatmul.mubr.f32.gmra.mxu0 %v31
  %v112 = vpop.f32.mrf.mxu0
  %v113 = vadd.f32 0.0, %v112
  %v114 = vpop.f32.mrf.mxu0
  %115 = vmatprep.mubr.f32.mxu0 0.0
  %116 = vmatmul.mubr.f32.gmra.mxu0 %v34
  %v117 = vpop.f32.mrf.mxu0
  %v118 = vadd.f32 0.0, %v117
  %v119 = vpop.f32.mrf.mxu0
  %120 = vdwg.mxu0
  %v122 = vsel %vm23, %v103, 0
  %v125 = vsel %vm23, %v108, 0
  %127 = vmatprep.subr.mxu0 0.0
  %128 = vmatpush1.xpose.msra.mxu0 0.0
  %129 = vmatprep.subr.mxu0 0.0
  %130 = vmatpush1.xpose.msra.mxu0 0.0
  %131 = vmatprep.subr.mxu0 0.0
  %132 = vmatpush1.xpose.msra.mxu0 0.0
  %133 = vmatprep.subr.mxu0 0.0
  %134 = vmatpush1.xpose.msra.mxu0 0.0
  %135 = vmatprep.subr.mxu0 0.0
  %136 = vmatpush1.xpose.msra.mxu0 0.0
  %137 = vmatprep.subr.mxu0 0.0
  %138 = vmatpush1.xpose.msra.mxu0 0.0
  %139 = vmatprep.subr.mxu0 0.0
  %140 = vmatpush1.xpose.msra.mxu0 0.0
  %141 = vmatprep.subr.mxu0 0.0
  %142 = vmatpush1.xpose.msra.mxu0 0.0
  %143 = vmatprep.subr.mxu0 0.0
  %144 = vmatpush1.xpose.msra.mxu0 0.0
  %145 = vmatprep.subr.mxu0 0.0
  %146 = vmatpush1.xpose.msra.mxu0 0.0
  %147 = vmatprep.subr.mxu0 0.0
  %148 = vmatpush1.xpose.msra.mxu0 0.0
  %149 = vmatprep.subr.mxu0 0.0
  %150 = vmatpush1.xpose.msra.mxu0 0.0
  %151 = vmatprep.subr.mxu0 0.0
  %152 = vmatpush1.xpose.msra.mxu0 0.0
  %153 = vmatprep.subr.mxu0 0.0
  %154 = vmatpush1.xpose.msra.mxu0 0.0
  %155 = vmatprep.subr.mxu0 0.0
  %156 = vmatpush1.xpose.msra.mxu0 %v28
  %157 = vmatprep.subr.mxu0 0.0
  %158 = vmatpush1.xpose.msra.mxu0 %v25
  %159 = vmatprep.subr.mxu0 0.0
  %160 = vmatpush2.xpose.msra.mxu0 0.0
  %161 = vmatprep.subr.mxu0 0.0
  %162 = vmatpush2.xpose.msra.mxu0 0.0
  %163 = vmatprep.subr.mxu0 0.0
  %164 = vmatpush2.xpose.msra.mxu0 0.0
  %165 = vmatprep.subr.mxu0 0.0
  %166 = vmatpush2.xpose.msra.mxu0 0.0
  %167 = vmatprep.subr.mxu0 0.0
  %168 = vmatpush2.xpose.msra.mxu0 0.0
  %169 = vmatprep.subr.mxu0 0.0
  %170 = vmatpush2.xpose.msra.mxu0 0.0
  %171 = vmatprep.subr.mxu0 0.0
  %172 = vmatpush2.xpose.msra.mxu0 0.0
  %173 = vmatprep.subr.mxu0 0.0
  %174 = vmatpush2.xpose.msra.mxu0 0.0
  %175 = vmatprep.subr.mxu0 0.0
  %176 = vmatpush2.xpose.msra.mxu0 0.0
  %177 = vmatprep.subr.mxu0 0.0
  %178 = vmatpush2.xpose.msra.mxu0 0.0
  %179 = vmatprep.subr.mxu0 0.0
  %180 = vmatpush2.xpose.msra.mxu0 0.0
  %181 = vmatprep.subr.mxu0 0.0
  %182 = vmatpush2.xpose.msra.mxu0 0.0
  %183 = vmatprep.subr.mxu0 0.0
  %184 = vmatpush2.xpose.msra.mxu0 0.0
  %185 = vmatprep.subr.mxu0 0.0
  %186 = vmatpush2.xpose.msra.mxu0 0.0
  %187 = vmatprep.subr.mxu0 0.0
  %188 = vmatpush2.xpose.msra.mxu0 0.0
  %189 = vmatprep.subr.mxu0 0.0
  %190 = vmatpush2.xpose.msra.mxu0 0.0
  %191 = vmatprep.mubr.f32.mxu0 0.0
  %192 = vmatmul.mubr.f32.gmra.mxu0 %v122
  %v193 = vpop.f32.mrf.mxu0
  %v194 = vadd.f32 %v19, %v193
  %v195 = vpop.f32.mrf.mxu0
  %196 = vmatprep.mubr.f32.mxu0 0.0
  %197 = vmatmul.mubr.f32.gmra.mxu0 %v125
  %v198 = vpop.f32.mrf.mxu0
  %v199 = vadd.f32 %v20, %v198
  %v200 = vpop.f32.mrf.mxu0
  %201 = vdwg.mxu0
  %v202 = vmul.f32 %v194, 0.5
  %v203 = vmul.f32 %v199, 0.5
  %v204 = vtanh.pop %v202
  %v205 = vtanh.pop %v203
  %v206 = vadd.f32 %v204, 1.0
  %v207 = vadd.f32 %v205, 1.0
  %v208 = vmul.f32 %v206, 0.5
  %v209 = vmul.f32 %v207, 0.5
  %vm210 = vcmask 130048
  %v212 = vsel %vm210, %v21, 0
  %v215 = vsel %vm210, %v22, 0
  %217 = vmatprep.subr.mxu0 0.0
  %218 = vmatpush1.msra.mxu0 0.0
  %219 = vmatprep.subr.mxu0 0.0
  %220 = vmatpush1.msra.mxu0 0.0
  %221 = vmatprep.subr.mxu0 0.0
  %222 = vmatpush1.msra.mxu0 0.0
  %223 = vmatprep.subr.mxu0 0.0
  %224 = vmatpush1.msra.mxu0 0.0
  %225 = vmatprep.subr.mxu0 0.0
  %226 = vmatpush1.msra.mxu0 0.0
  %227 = vmatprep.subr.mxu0 0.0
  %228 = vmatpush1.msra.mxu0 0.0
  %229 = vmatprep.subr.mxu0 0.0
  %230 = vmatpush1.msra.mxu0 0.0
  %231 = vmatprep.subr.mxu0 0.0
  %232 = vmatpush1.msra.mxu0 0.0
  %233 = vmatprep.subr.mxu0 0.0
  %234 = vmatpush1.msra.mxu0 0.0
  %235 = vmatprep.subr.mxu0 0.0
  %236 = vmatpush1.msra.mxu0 0.0
  %237 = vmatprep.subr.mxu0 0.0
  %238 = vmatpush1.msra.mxu0 0.0
  %239 = vmatprep.subr.mxu0 0.0
  %240 = vmatpush1.msra.mxu0 0.0
  %241 = vmatprep.subr.mxu0 0.0
  %242 = vmatpush1.msra.mxu0 0.0
  %243 = vmatprep.subr.mxu0 0.0
  %244 = vmatpush1.msra.mxu0 0.0
  %245 = vmatprep.subr.mxu0 0.0
  %246 = vmatpush1.msra.mxu0 %v209
  %247 = vmatprep.subr.mxu0 0.0
  %248 = vmatpush1.msra.mxu0 %v208
  %249 = vmatprep.subr.mxu0 0.0
  %250 = vmatpush2.msra.mxu0 0.0
  %251 = vmatprep.subr.mxu0 0.0
  %252 = vmatpush2.msra.mxu0 0.0
  %253 = vmatprep.subr.mxu0 0.0
  %254 = vmatpush2.msra.mxu0 0.0
  %255 = vmatprep.subr.mxu0 0.0
  %256 = vmatpush2.msra.mxu0 0.0
  %257 = vmatprep.subr.mxu0 0.0
  %258 = vmatpush2.msra.mxu0 0.0
  %259 = vmatprep.subr.mxu0 0.0
  %260 = vmatpush2.msra.mxu0 0.0
  %261 = vmatprep.subr.mxu0 0.0
  %262 = vmatpush2.msra.mxu0 0.0
  %263 = vmatprep.subr.mxu0 0.0
  %264 = vmatpush2.msra.mxu0 0.0
  %265 = vmatprep.subr.mxu0 0.0
  %266 = vmatpush2.msra.mxu0 0.0
  %267 = vmatprep.subr.mxu0 0.0
  %268 = vmatpush2.msra.mxu0 0.0
  %269 = vmatprep.subr.mxu0 0.0
  %270 = vmatpush2.msra.mxu0 0.0
  %271 = vmatprep.subr.mxu0 0.0
  %272 = vmatpush2.msra.mxu0 0.0
  %273 = vmatprep.subr.mxu0 0.0
  %274 = vmatpush2.msra.mxu0 0.0
  %275 = vmatprep.subr.mxu0 0.0
  %276 = vmatpush2.msra.mxu0 0.0
  %277 = vmatprep.subr.mxu0 0.0
  %278 = vmatpush2.msra.mxu0 0.0
  %279 = vmatprep.subr.mxu0 0.0
  %280 = vmatpush2.msra.mxu0 0.0
  %281 = vmatprep.mubr.f32.mxu0 0.0
  %282 = vmatmul.mubr.f32.gmra.mxu0 %v212
  %v283 = vpop.f32.mrf.mxu0
  %v284 = vadd.f32 0.0, %v283
  %v285 = vpop.f32.mrf.mxu0
  %286 = vmatprep.mubr.f32.mxu0 0.0
  %287 = vmatmul.mubr.f32.gmra.mxu0 %v215
  %v288 = vpop.f32.mrf.mxu0
  %v289 = vadd.f32 0.0, %v288
  %v290 = vpop.f32.mrf.mxu0
  %291 = vdwg.mxu0
  %v292 = vsel %vm210, %v284, -inf
  %v293 = vsel %vm210, %v289, -inf
  %v294 = vmax.f32 %v292, %v293
  %v295 = vrot.slane %v294, 4
  %v296 = vmax.f32 %v294, %v295
  %v297 = vrot.slane %v296, 2
  %v298 = vmax.f32 %v296, %v297
  %v299 = vrot.slane %v298, 1
  %v300 = vmax.f32 %v298, %v299
  %v301 = vsub.f32 %v284, %v300
  %v302 = vsub.f32 %v289, %v300
  %v303 = vmul.f32 %v301, 1.442695
  %v304 = vpow.pop %v303
  %v305 = vmul.f32 %v302, 1.442695
  %v306 = vpow.pop %v305
  %v307 = vsel %vm210, %v304, 0.0
  %v308 = vsel %vm210, %v306, 0.0
  %v309 = vadd.f32 %v307, %v308
  %v310 = vrot.slane %v309, 4
  %v311 = vadd.f32 %v309, %v310
  %v312 = vrot.slane %v311, 2
  %v313 = vadd.f32 %v311, %v312
  %v314 = vrot.slane %v313, 1
  %v315 = vadd.f32 %v313, %v314
  %v316 = vrcp.pop %v315
  %v317 = vmul.f32 %v304, %v316
  %v318 = vmul.f32 %v306, %v316
  %319 = vst.msk [vmem:[%s2] sm:$0xff] %vm210, %v317
  %320 = vst.msk [vmem:[%s2 + $0x8] sm:$0xff] %vm210, %v318
  %v322 = vsel %vm23, %v113, 0
  %v325 = vsel %vm23, %v118, 0
  %327 = vmatprep.subr.mxu0 0.0
  %328 = vmatpush1.xpose.msra.mxu0 0.0
  %329 = vmatprep.subr.mxu0 0.0
  %330 = vmatpush1.xpose.msra.mxu0 0.0
  %331 = vmatprep.subr.mxu0 0.0
  %332 = vmatpush1.xpose.msra.mxu0 0.0
  %333 = vmatprep.subr.mxu0 0.0
  %334 = vmatpush1.xpose.msra.mxu0 0.0
  %335 = vmatprep.subr.mxu0 0.0
  %336 = vmatpush1.xpose.msra.mxu0 0.0
  %337 = vmatprep.subr.mxu0 0.0
  %338 = vmatpush1.xpose.msra.mxu0 0.0
  %339 = vmatprep.subr.mxu0 0.0
  %340 = vmatpush1.xpose.msra.mxu0 0.0
  %341 = vmatprep.subr.mxu0 0.0
  %342 = vmatpush1.xpose.msra.mxu0 0.0
  %343 = vmatprep.subr.mxu0 0.0
  %344 = vmatpush1.xpose.msra.mxu0 0.0
  %345 = vmatprep.subr.mxu0 0.0
  %346 = vmatpush1.xpose.msra.mxu0 0.0
  %347 = vmatprep.subr.mxu0 0.0
  %348 = vmatpush1.xpose.msra.mxu0 0.0
  %349 = vmatprep.subr.mxu0 0.0
  %350 = vmatpush1.xpose.msra.mxu0 0.0
  %351 = vmatprep.subr.mxu0 0.0
  %352 = vmatpush1.xpose.msra.mxu0 0.0
  %353 = vmatprep.subr.mxu0 0.0
  %354 = vmatpush1.xpose.msra.mxu0 0.0
  %355 = vmatprep.subr.mxu0 0.0
  %356 = vmatpush1.xpose.msra.mxu0 %v34
  %357 = vmatprep.subr.mxu0 0.0
  %358 = vmatpush1.xpose.msra.mxu0 %v31
  %359 = vmatprep.subr.mxu0 0.0
  %360 = vmatpush2.xpose.msra.mxu0 0.0
  %361 = vmatprep.subr.mxu0 0.0
  %362 = vmatpush2.xpose.msra.mxu0 0.0
  %363 = vmatprep.subr.mxu0 0.0
  %364 = vmatpush2.xpose.msra.mxu0 0.0
  %365 = vmatprep.subr.mxu0 0.0
  %366 = vmatpush2.xpose.msra.mxu0 0.0
  %367 = vmatprep.subr.mxu0 0.0
  %368 = vmatpush2.xpose.msra.mxu0 0.0
  %369 = vmatprep.subr.mxu0 0.0
  %370 = vmatpush2.xpose.msra.mxu0 0.0
  %371 = vmatprep.subr.mxu0 0.0
  %372 = vmatpush2.xpose.msra.mxu0 0.0
  %373 = vmatprep.subr.mxu0 0.0
  %374 = vmatpush2.xpose.msra.mxu0 0.0
  %375 = vmatprep.subr.mxu0 0.0
  %376 = vmatpush2.xpose.msra.mxu0 0.0
  %377 = vmatprep.subr.mxu0 0.0
  %378 = vmatpush2.xpose.msra.mxu0 0.0
  %379 = vmatprep.subr.mxu0 0.0
  %380 = vmatpush2.xpose.msra.mxu0 0.0
  %381 = vmatprep.subr.mxu0 0.0
  %382 = vmatpush2.xpose.msra.mxu0 0.0
  %383 = vmatprep.subr.mxu0 0.0
  %384 = vmatpush2.xpose.msra.mxu0 0.0
  %385 = vmatprep.subr.mxu0 0.0
  %386 = vmatpush2.xpose.msra.mxu0 0.0
  %387 = vmatprep.subr.mxu0 0.0
  %388 = vmatpush2.xpose.msra.mxu0 0.0
  %389 = vmatprep.subr.mxu0 0.0
  %390 = vmatpush2.xpose.msra.mxu0 0.0
  %391 = vmatprep.mubr.f32.mxu0 0.0
  %392 = vmatmul.mubr.f32.gmra.mxu0 %v322
  %v393 = vpop.f32.mrf.mxu0
  %v394 = vadd.f32 %v19, %v393
  %v395 = vpop.f32.mrf.mxu0
  %396 = vmatprep.mubr.f32.mxu0 0.0
  %397 = vmatmul.mubr.f32.gmra.mxu0 %v325
  %v398 = vpop.f32.mrf.mxu0
  %v399 = vadd.f32 %v20, %v398
  %v400 = vpop.f32.mrf.mxu0
  %401 = vdwg.mxu0
  %v402 = vmul.f32 %v394, 0.5
  %v403 = vmul.f32 %v399, 0.5
  %v404 = vtanh.pop %v402
  %v405 = vtanh.pop %v403
  %v406 = vadd.f32 %v404, 1.0
  %v407 = vadd.f32 %v405, 1.0
  %v408 = vmul.f32 %v406, 0.5
  %v409 = vmul.f32 %v407, 0.5
  %410 = vmatprep.subr.mxu0 0.0
  %411 = vmatpush1.msra.mxu0 0.0
  %412 = vmatprep.subr.mxu0 0.0
  %413 = vmatpush1.msra.mxu0 0.0
  %414 = vmatprep.subr.mxu0 0.0
  %415 = vmatpush1.msra.mxu0 0.0
  %416 = vmatprep.subr.mxu0 0.0
  %417 = vmatpush1.msra.mxu0 0.0
  %418 = vmatprep.subr.mxu0 0.0
  %419 = vmatpush1.msra.mxu0 0.0
  %420 = vmatprep.subr.mxu0 0.0
  %421 = vmatpush1.msra.mxu0 0.0
  %422 = vmatprep.subr.mxu0 0.0
  %423 = vmatpush1.msra.mxu0 0.0
  %424 = vmatprep.subr.mxu0 0.0
  %425 = vmatpush1.msra.mxu0 0.0
  %426 = vmatprep.subr.mxu0 0.0
  %427 = vmatpush1.msra.mxu0 0.0
  %428 = vmatprep.subr.mxu0 0.0
  %429 = vmatpush1.msra.mxu0 0.0
  %430 = vmatprep.subr.mxu0 0.0
  %431 = vmatpush1.msra.mxu0 0.0
  %432 = vmatprep.subr.mxu0 0.0
  %433 = vmatpush1.msra.mxu0 0.0
  %434 = vmatprep.subr.mxu0 0.0
  %435 = vmatpush1.msra.mxu0 0.0
  %436 = vmatprep.subr.mxu0 0.0
  %437 = vmatpush1.msra.mxu0 0.0
  %438 = vmatprep.subr.mxu0 0.0
  %439 = vmatpush1.msra.mxu0 %v409
  %440 = vmatprep.subr.mxu0 0.0
  %441 = vmatpush1.msra.mxu0 %v408
  %442 = vmatprep.subr.mxu0 0.0
  %443 = vmatpush2.msra.mxu0 0.0
  %444 = vmatprep.subr.mxu0 0.0
  %445 = vmatpush2.msra.mxu0 0.0
  %446 = vmatprep.subr.mxu0 0.0
  %447 = vmatpush2.msra.mxu0 0.0
  %448 = vmatprep.subr.mxu0 0.0
  %449 = vmatpush2.msra.mxu0 0.0
  %450 = vmatprep.subr.mxu0 0.0
  %451 = vmatpush2.msra.mxu0 0.0
  %452 = vmatprep.subr.mxu0 0.0
  %453 = vmatpush2.msra.mxu0 0.0
  %454 = vmatprep.subr.mxu0 0.0
  %455 = vmatpush2.msra.mxu0 0.0
  %456 = vmatprep.subr.mxu0 0.0
  %457 = vmatpush2.msra.mxu0 0.0
  %458 = vmatprep.subr.mxu0 0.0
  %459 = vmatpush2.msra.mxu0 0.0
  %460 = vmatprep.subr.mxu0 0.0
  %461 = vmatpush2.msra.mxu0 0.0
  %462 = vmatprep.subr.mxu0 0.0
  %463 = vmatpush2.msra.mxu0 0.0
  %464 = vmatprep.subr.mxu0 0.0
  %465 = vmatpush2.msra.mxu0 0.0
  %466 = vmatprep.subr.mxu0 0.0
  %467 = vmatpush2.msra.mxu0 0.0
  %468 = vmatprep.subr.mxu0 0.0
  %469 = vmatpush2.msra.mxu0 0.0
  %470 = vmatprep.subr.mxu0 0.0
  %471 = vmatpush2.msra.mxu0 0.0
  %472 = vmatprep.subr.mxu0 0.0
  %473 = vmatpush2.msra.mxu0 0.0
  %474 = vmatprep.mubr.f32.mxu0 0.0
  %475 = vmatmul.mubr.f32.gmra.mxu0 %v212
  %v476 = vpop.f32.mrf.mxu0
  %v477 = vadd.f32 0.0, %v476
  %v478 = vpop.f32.mrf.mxu0
  %479 = vmatprep.mubr.f32.mxu0 0.0
  %480 = vmatmul.mubr.f32.gmra.mxu0 %v215
  %v481 = vpop.f32.mrf.mxu0
  %v482 = vadd.f32 0.0, %v481
  %v483 = vpop.f32.mrf.mxu0
  %484 = vdwg.mxu0
  %v485 = vsel %vm210, %v477, -inf
  %v486 = vsel %vm210, %v482, -inf
  %v487 = vmax.f32 %v485, %v486
  %v488 = vrot.slane %v487, 4
  %v489 = vmax.f32 %v487, %v488
  %v490 = vrot.slane %v489, 2
  %v491 = vmax.f32 %v489, %v490
  %v492 = vrot.slane %v491, 1
  %v493 = vmax.f32 %v491, %v492
  %v494 = vsub.f32 %v477, %v493
  %v495 = vsub.f32 %v482, %v493
  %v496 = vmul.f32 %v494, 1.442695
  %v497 = vpow.pop %v496
  %v498 = vmul.f32 %v495, 1.442695
  %v499 = vpow.pop %v498
  %v500 = vsel %vm210, %v497, 0.0
  %v501 = vsel %vm210, %v499, 0.0
  %v502 = vadd.f32 %v500, %v501
  %v503 = vrot.slane %v502, 4
  %v504 = vadd.f32 %v502, %v503
  %v505 = vrot.slane %v504, 2
  %v506 = vadd.f32 %v504, %v505
  %v507 = vrot.slane %v506, 1
  %v508 = vadd.f32 %v506, %v507
  %v509 = vrcp.pop %v508
  %v510 = vmul.f32 %v497, %v509
  %v511 = vmul.f32 %v499, %v509
  %512 = vst.msk [vmem:[%s2 + $0x10] sm:$0xff] %vm210, %v510
  %513 = vst.msk [vmem:[%s2 + $0x18] sm:$0xff] %vm210, %v511
  // Predicated region
  $region10: #{tpu_custom_call.1} parent=0 // pred_check
    _
  $region11: #{tpu_custom_call.1} parent=0 // pred_check_branch
    %515 = sbr.rel (0) target = $region13
  $region12: #{tpu_custom_call.1} parent=0 // pred_region
    _
  $region13: #{tpu_custom_call.1} parent=0 // pred_fallthru
    _
  // Predicated region
  $region14: #{tpu_custom_call.1} parent=0 // pred_check
    _
  $region15: #{tpu_custom_call.1} parent=0 // pred_check_branch
    %517 = sbr.rel (0) target = $region17
  $region16: #{tpu_custom_call.1} parent=0 // pred_region
    _
  $region17: #{tpu_custom_call.1} parent=0 // pred_fallthru
    _

</llo_original>
